<compile_context>
chip_gen: v7x
topology: tpu7x:2x2x1
jax: 0.10.0
libtpu: 0.0.40
codegen_flags: <defaults>
</compile_context>

<pallas_src>
import jax
import jax.numpy as jnp
from jax.experimental import pallas as pl
from jax.experimental.pallas import tpu as pltpu


def _fused_convt_bn_silu_kernel(w_ref, x_ref, shift_ref, o_ref):
    """One (batch n, spatial tile) grid step.

    w_ref     : (Cout*4, Cin)   BN-scale-folded conv-transpose weight (resident)
    x_ref     : (1, Cin, T)     input channels x spatial tile
    shift_ref : (1, Cout*4, 1)  per-(n, channel*tap) additive term
                                (conv bias + BN shift + optional time embed)
    o_ref     : (1, Cout*4, T)  pre-interleave output tile
    """
    acc = jnp.dot(w_ref[...], x_ref[0], preferred_element_type=jnp.float32)
    y = acc + shift_ref[0]                      # broadcast (C4, 1) over lanes
    # SiLU fused into the matmul epilogue (EUP/VPU slots are free here).
    o_ref[0] = (y * jax.nn.sigmoid(y)).astype(o_ref.dtype)


def _pick_spatial_tile(hw, c4, cin, itemsize, target_bytes=2 * 1024 * 1024):
    """Largest spatial tile that satisfies the (8,128)/full-dim lane rule and
    keeps the (input + output) block under ~target_bytes so double-buffered
    pipelining fits comfortably in VMEM on every TPU generation (incl. v7x)."""
    per_col_bytes = (c4 + cin) * itemsize
    if hw * per_col_bytes <= target_bytes or hw % 128 != 0:
        return hw          # small enough, or only the full extent is legal
    cands = [t for t in range(128, hw, 128)
             if hw % t == 0 and t * per_col_bytes <= target_bytes]
    return max(cands) if cands else hw


def convt_block_forward(x, conv_w, conv_b,
                        bn_gamma, bn_beta, bn_mean, bn_var,
                        time_code=None, pen_params=None,
                        bn_eps=1e-5, ln_eps=1e-5):
    """convtBlock.forward: ConvT(2,2,stride=2) -> BatchNorm2d -> (+pen) -> SiLU."""
    N, Cin, H, W = x.shape
    assert conv_w.shape[0] == Cin and conv_w.shape[2:] == (2, 2)
    Cout = conv_w.shape[1]
    C4 = Cout * 4
    HW = H * W
    f32 = jnp.float32

    # ---- Fold BatchNorm (inference / running-stats form) into scale & shift.
    # TODO(synk): training-mode BatchNorm (per-batch statistics) would need a
    # second reduction pass over the conv output and cannot be folded here.
    s = (bn_gamma / jnp.sqrt(bn_var + bn_eps)).astype(f32)            # (Cout,)
    t = (bn_beta - bn_mean * s).astype(f32)                           # (Cout,)

    # Conv-transpose weight as a (Cout*4, Cin) matrix, row = co*4 + di*2 + dj,
    # with the BN scale folded in (tiny tensor: free to rearrange in XLA).
    w_mat = jnp.transpose(conv_w, (1, 2, 3, 0)).reshape(C4, Cin).astype(f32)
    w_mat = (w_mat * jnp.repeat(s, 4)[:, None]).astype(x.dtype)

    # Per-(n, channel*tap) additive shift: conv bias + BN shift (+ time embed).
    shift = jnp.repeat(conv_b.astype(f32) * s + t, 4)                 # (C4,)
    if time_code is not None:
        # TODO(synk): the pen MLP (Linear+LayerNorm+SiLU over (N, time_dim)) is
        # far below one (8,128) TPU tile, so it stays in XLA; its result is
        # folded into the fused kernel's per-(n, channel) shift.
        lin_w, lin_b, ln_g, ln_b = pen_params
        h = time_code.astype(f32) @ lin_w.astype(f32).T + lin_b.astype(f32)
        mu = jnp.mean(h, axis=-1, keepdims=True)
        var = jnp.var(h, axis=-1, keepdims=True)
        hn = (h - mu) * jax.lax.rsqrt(var + ln_eps) * ln_g + ln_b
        ps = hn * jax.nn.sigmoid(hn)                                  # (N, Cout)
        shift = shift[None, :] + jnp.repeat(ps, 4, axis=-1)           # (N, C4)
    else:
        shift = jnp.broadcast_to(shift[None, :], (N, C4))
    shift = shift.reshape(N, C4, 1).astype(f32)

    # ---- Fused Pallas kernel over (batch, spatial tile). Lane dim = spatial.
    x3 = x.reshape(N, Cin, HW)                                        # metadata only
    tile = _pick_spatial_tile(HW, C4, Cin, jnp.dtype(x.dtype).itemsize)
    grid = (N, HW // tile)

    out3 = pl.pallas_call(
        _fused_convt_bn_silu_kernel,
        out_shape=jax.ShapeDtypeStruct((N, C4, HW), x.dtype),
        grid_spec=pltpu.PrefetchScalarGridSpec(
            num_scalar_prefetch=0,
            grid=grid,
            in_specs=[
                pl.BlockSpec((C4, Cin), lambda n, h: (0, 0)),          # resident
                pl.BlockSpec((1, Cin, tile), lambda n, h: (n, 0, h)),
                pl.BlockSpec((1, C4, 1), lambda n, h: (n, 0, 0)),
            ],
            out_specs=pl.BlockSpec((1, C4, tile), lambda n, h: (n, 0, h)),
        ),
        compiler_params=pltpu.CompilerParams(
            dimension_semantics=("parallel", "parallel"),
            # <= scoped default on v6e/v7x, raises v5e's 16 MiB default; blocks
            # are capped at ~2 MiB so double-buffering stays well inside this.
            vmem_limit_bytes=32 * 1024 * 1024,
        ),
    )(w_mat, x3, shift)

    # Interleave the 2x2 taps into NCHW:
    # (n, co, di, dj, i, j) -> out[n, co, 2i+di, 2j+dj].
    out = jnp.transpose(out3.reshape(N, Cout, 2, 2, H, W), (0, 1, 4, 2, 5, 3))
    return out.reshape(N, Cout, 2 * H, 2 * W)


def _reference_forward(x, conv_w, conv_b, bn_gamma, bn_beta, bn_mean, bn_var,
                       time_code=None, pen_params=None, bn_eps=1e-5, ln_eps=1e-5):
    """Pure-JAX reference with identical semantics (inference-mode BatchNorm)."""
    N, Cin, H, W = x.shape
    Cout = conv_w.shape[1]
    y = jnp.einsum('ncij,ckpq->nkipjq', x, conv_w).reshape(N, Cout, 2 * H, 2 * W)
    y = y + conv_b[None, :, None, None]
    inv = 1.0 / jnp.sqrt(bn_var + bn_eps)
    y = ((y - bn_mean[None, :, None, None]) * inv[None, :, None, None]
         * bn_gamma[None, :, None, None] + bn_beta[None, :, None, None])
    if time_code is not None:
        lin_w, lin_b, ln_g, ln_b = pen_params
        h = time_code @ lin_w.T + lin_b
        mu = jnp.mean(h, axis=-1, keepdims=True)
        var = jnp.var(h, axis=-1, keepdims=True)
        hn = (h - mu) / jnp.sqrt(var + ln_eps) * ln_g + ln_b
        ps = hn * jax.nn.sigmoid(hn)
        y = y + ps[:, :, None, None]
    return y * jax.nn.sigmoid(y)


if __name__ == "__main__":
    key = jax.random.PRNGKey(0)
    keys = jax.random.split(key, 12)
    N, Cin, Cout, H, W, Tdim = 2, 4, 8, 16, 16, 32

    x = jax.random.normal(keys[0], (N, Cin, H, W), dtype=jnp.float32)
    conv_w = 0.30 * jax.random.normal(keys[1], (Cin, Cout, 2, 2), jnp.float32)
    conv_b = 0.10 * jax.random.normal(keys[2], (Cout,), jnp.float32)

    bn_gamma = 1.0 + 0.10 * jax.random.normal(keys[3], (Cout,), jnp.float32)
    bn_beta = 0.10 * jax.random.normal(keys[4], (Cout,), jnp.float32)
    bn_mean = 0.10 * jax.random.normal(keys[5], (Cout,), jnp.float32)
    bn_var = 1.0 + 0.10 * jnp.abs(jax.random.normal(keys[6], (Cout,), jnp.float32))

    lin_w = 0.20 * jax.random.normal(keys[7], (Cout, Tdim), jnp.float32)
    lin_b = 0.10 * jax.random.normal(keys[8], (Cout,), jnp.float32)
    ln_g = 1.0 + 0.10 * jax.random.normal(keys[9], (Cout,), jnp.float32)
    ln_b = 0.10 * jax.random.normal(keys[10], (Cout,), jnp.float32)
    time_code = jax.random.normal(keys[11], (N, Tdim), jnp.float32)

    # Path 1: time_dim=None (pen == Identity).
    y = convt_block_forward(x, conv_w, conv_b, bn_gamma, bn_beta, bn_mean, bn_var)
    jax.block_until_ready(y)
    y_ref = _reference_forward(x, conv_w, conv_b, bn_gamma, bn_beta, bn_mean, bn_var)
    assert y.shape == (N, Cout, 2 * H, 2 * W) and y.dtype == x.dtype
    assert jnp.allclose(y, y_ref, atol=2e-2, rtol=2e-2), \
        float(jnp.max(jnp.abs(y - y_ref)))

    # Path 2: with time embedding (pen = Linear -> LayerNorm -> SiLU).
    y_t = convt_block_forward(x, conv_w, conv_b, bn_gamma, bn_beta, bn_mean, bn_var,
                              time_code=time_code,
                              pen_params=(lin_w, lin_b, ln_g, ln_b))
    jax.block_until_ready(y_t)
    y_t_ref = _reference_forward(x, conv_w, conv_b, bn_gamma, bn_beta, bn_mean,
                                 bn_var, time_code=time_code,
                                 pen_params=(lin_w, lin_b, ln_g, ln_b))
    assert jnp.allclose(y_t, y_t_ref, atol=2e-2, rtol=2e-2), \
        float(jnp.max(jnp.abs(y_t - y_t_ref)))

    print("KERNEL_OK")
</pallas_src>

<mosaic_0001>
module attributes {stable_mosaic.version = 11 : i64} {
  func.func @_fused_convt_bn_silu_kernel(%arg0: i32, %arg1: i32, %arg2: memref<32x4xf32, #tpu.memory_space<vmem>>, %arg3: memref<1x4x256xf32, #tpu.memory_space<vmem>>, %arg4: memref<1x32x1xf32, #tpu.memory_space<vmem>>, %arg5: memref<1x32x256xf32, #tpu.memory_space<vmem>>) attributes {dimension_semantics = [#tpu.dimension_semantics<parallel>, #tpu.dimension_semantics<parallel>], iteration_bounds = array<i64: 2, 1>, scalar_prefetch = 0 : i64, scratch_operands = 0 : i64, tpu.core_type = #tpu.core_type<tc>, window_params = [{pipeline_mode = #tpu.pipeline_mode<synchronous>, transform_indices = @transform_0, window_bounds = array<i64: 32, 4>}, {transform_indices = @transform_1, window_bounds = array<i64: 1, 4, 256>}, {transform_indices = @transform_2, window_bounds = array<i64: 1, 32, 1>}, {transform_indices = @transform_3, window_bounds = array<i64: 1, 32, 256>}]} {
    %c0 = arith.constant 0 : index
    %c0_0 = arith.constant 0 : index
    %0 = vector.load %arg2[%c0, %c0_0] : memref<32x4xf32, #tpu.memory_space<vmem>>, vector<32x4xf32>
    %c0_1 = arith.constant 0 : index
    %c0_2 = arith.constant 0 : index
    %c0_3 = arith.constant 0 : index
    %1 = vector.load %arg3[%c0_1, %c0_2, %c0_3] : memref<1x4x256xf32, #tpu.memory_space<vmem>>, vector<1x4x256xf32>
    %2 = vector.shape_cast %1 : vector<1x4x256xf32> to vector<4x256xf32>
    %cst = arith.constant dense<0.000000e+00> : vector<32x256xf32>
    %3 = tpu.matmul %0, %2, %cst {dimension_numbers = #tpu.dot_dimension_numbers<[1], [0], [0], [1], [0, 0, 1, 1], [], []>} : vector<32x4xf32>, vector<4x256xf32>, vector<32x256xf32> -> vector<32x256xf32>
    %c0_4 = arith.constant 0 : index
    %c0_5 = arith.constant 0 : index
    %c0_6 = arith.constant 0 : index
    %4 = vector.load %arg4[%c0_4, %c0_5, %c0_6] : memref<1x32x1xf32, #tpu.memory_space<vmem>>, vector<1x32x1xf32>
    %5 = vector.shape_cast %4 : vector<1x32x1xf32> to vector<32x1xf32>
    %6 = vector.broadcast %5 : vector<32x1xf32> to vector<32x256xf32>
    %7 = arith.addf %3, %6 : vector<32x256xf32>
    %8 = arith.negf %7 : vector<32x256xf32>
    %9 = math.exp %8 : vector<32x256xf32>
    %cst_7 = arith.constant 1.000000e+00 : f32
    %10 = vector.broadcast %cst_7 : f32 to vector<32x256xf32>
    %11 = arith.addf %10, %9 : vector<32x256xf32>
    %12 = arith.divf %10, %11 : vector<32x256xf32>
    %13 = arith.mulf %7, %12 : vector<32x256xf32>
    %c0_8 = arith.constant 0 : index
    %c0_9 = arith.constant 0 : index
    %c0_10 = arith.constant 0 : index
    %14 = vector.load %arg5[%c0_8, %c0_9, %c0_10] : memref<1x32x256xf32, #tpu.memory_space<vmem>>, vector<1x32x256xf32>
    %15 = vector.shape_cast %14 : vector<1x32x256xf32> to vector<32x256xf32>
    %16 = vector.shape_cast %13 : vector<32x256xf32> to vector<1x32x256xf32>
    tpu.vector_store %arg5[%c0_8, %c0_9, %c0_10], %16 {strides = array<i32>} : memref<1x32x256xf32, #tpu.memory_space<vmem>>, vector<1x32x256xf32>,
    return
  }
  func.func @transform_0(%arg0: i32, %arg1: i32) -> (i32, i32) {
    %c0_i32 = arith.constant 0 : i32
    %c0_i32_0 = arith.constant 0 : i32
    %c0_i32_1 = arith.constant 0 : i32
    return %c0_i32, %c0_i32_0 : i32, i32
  }
  func.func @transform_1(%arg0: i32, %arg1: i32) -> (i32, i32, i32) {
    %c0_i32 = arith.constant 0 : i32
    %c0_i32_0 = arith.constant 0 : i32
    return %arg0, %c0_i32, %arg1 : i32, i32, i32
  }
  func.func @transform_2(%arg0: i32, %arg1: i32) -> (i32, i32, i32) {
    %c0_i32 = arith.constant 0 : i32
    %c0_i32_0 = arith.constant 0 : i32
    %c0_i32_1 = arith.constant 0 : i32
    return %arg0, %c0_i32, %c0_i32_0 : i32, i32, i32
  }
  func.func @transform_3(%arg0: i32, %arg1: i32) -> (i32, i32, i32) {
    %c0_i32 = arith.constant 0 : i32
    %c0_i32_0 = arith.constant 0 : i32
    return %arg0, %c0_i32, %arg1 : i32, i32, i32
  }
}

</mosaic_0001>

<llo_original>
// kernel: tpu_custom_call.1
$region0: #{tpu_custom_call.1}
  #allocation0 [shape = 'u32[]', space=smem, size = 0x4, offset = 0x4, fixed_abs, tag = 'smem constant byte address 0x4 - core index']
  #allocation1 [shape = 'u32[144,128]{1,0:T(1,128)}', space=vmem, size = 0x12000, scoped, tag = 'internal scratch']
  %s0 = inlined_call_operand.vmem [shape: f32[32,4], index: 0, kind: input, shape index: {}]
  %s1 = inlined_call_operand.vmem [shape: f32[2,4,256], index: 1, kind: input, shape index: {}]
  %s2 = inlined_call_operand.vmem [shape: f32[2,32,1], index: 2, kind: input, shape index: {}]
  %s3 = inlined_call_operand.hbm [shape: f32[2,32,256], index: 3, kind: output, shape index: {}]
  %s4 = sld [smem:[#allocation0]]
  $region45: #{tpu_custom_call.1} parent=0
    _
  %s6 = ssub.s32 1, %s4
  %s7 = scalar_select 0, %s6, %s4
  $region1: #{tpu_custom_call.1} parent=0
    #allocation2 [shape = 'u8[65536]{0}', space=vmem, size = 0x10000, scoped, tag = 'output window, operand 0']
    #allocation3 [shape = 's32[2]{0}', space=sflag, size = 0x8, scoped, tag = 'scoped memory for tpu_custom_call.1']
    %8 = vsyncpa [#allocation3], 0
    %s9 = scalar_lea.sflag [#allocation3], 1
    %10 = vsyncpa %s9, 0
    loop: start=0, step=1, limit=4
    $region2: #{tpu_custom_call.1} parent=1 // loop_pre_header
      _
    $region3: #{tpu_custom_call.1} parent=1 // loop_header
      %s12 = sphi 0, %s16
      %p13 = scmp.ge.s32.totalorder %s12, 4
      %s19 = sphi 0, %s31
      %s20 = sphi 0, %s27
      %s21 = sphi 0, %s19
      %s22 = sphi 0, %s20
      %s23 = sphi 0, %s21
      %s24 = sphi 0, %s22
      %s32 = sphi 0, %s32
      %s34 = sphi 0, %s32
      %s35 = sphi 0, %s34
      %s49 = sphi 0, %s35
      %s57 = sphi 0, %s59
      %s60 = sphi 0, %s57
      %s61 = sphi 0, %s60
      %s77 = sphi 0, %s61
      %s83 = sphi 0, %s85
      %s86 = sphi 0, %s83
      %s87 = sphi 0, %s86
      %s103 = sphi 0, %s87
      %s111 = sphi 0, %s113
      %s114 = sphi 0, %s111
      %s115 = sphi 0, %s114
      %s131 = sphi 0, %s115
    $region4: #{tpu_custom_call.1} parent=1 // loop_header_branch
      %15 = sbr.rel (%p13) target = $region8
    $region5: #{tpu_custom_call.1} parent=1 // loop_body
      %s17 = ssub.s32 %s12, 1
      %s18 = ssub.s32 %s12, 2
      %s25 = sadd.s32 1, %s20
      %p26 = scmp.ge.s32.totalorder %s25, 1
      %s27 = scalar_select %p26, 0, %s25
      %s28 = sadd.s32 1, %s19
      %s29 = scalar_select %p26, %s28, %s19
      %p30 = scmp.ge.s32.totalorder %s29, 2
      %s31 = scalar_select %p30, 0, %s29
      %s33 = sadd.s32 %s32, 1
      %p36 = scmp.eq.s32.totalorder %s12, 1
      %p37 = scmp.ne.s32.totalorder %s32, %s34
      %p38 = scmp.eq.s32.totalorder %s12, 0
      %p39 = por %p37, %p38
      %p40 = scmp.ne.s32.totalorder %s32, %s34
      %p41 = scmp.eq.s32.totalorder %s17, 1
      %p42 = por %p40, %p41
      %p43 = scmp.ne.s32.totalorder %s34, %s35
      %p44 = scmp.eq.s32.totalorder %s17, 0
      %p45 = por %p43, %p44
      %p46 = scmp.ne.s32.totalorder %s34, %s35
      %p47 = scmp.eq.s32.totalorder %s18, 1
      %p48 = por %p46, %p47
      %p50 = scmp.ne.s32.totalorder %s35, %s49
      %p51 = scmp.eq.s32.totalorder %s18, 0
      %p52 = por %p50, %p51
      %s53 = ssub.s32 %s19, %s31
      %s54 = ssub.s32 %s20, %s27
      %s55 = sor.u32 %s53, %s54
      %p56 = scmp.eq.s32.totalorder %s55, 0
      %s58 = sadd.s32 %s57, 1
      %s59 = scalar_select %p56, %s57, %s58
      %p62 = pneg %p56
      %p63 = scmp.eq.s32.totalorder %s12, 1
      %p64 = por %p62, %p63
      %p65 = scmp.ne.s32.totalorder %s57, %s60
      %p66 = scmp.eq.s32.totalorder %s12, 0
      %p67 = por %p65, %p66
      %p68 = scmp.ne.s32.totalorder %s57, %s60
      %p69 = scmp.eq.s32.totalorder %s17, 1
      %p70 = por %p68, %p69
      %p71 = scmp.ne.s32.totalorder %s60, %s61
      %p72 = scmp.eq.s32.totalorder %s17, 0
      %p73 = por %p71, %p72
      %p74 = scmp.ne.s32.totalorder %s60, %s61
      %p75 = scmp.eq.s32.totalorder %s18, 1
      %p76 = por %p74, %p75
      %p78 = scmp.ne.s32.totalorder %s61, %s77
      %p79 = scmp.eq.s32.totalorder %s18, 0
      %p80 = por %p78, %p79
      %s81 = ssub.s32 %s19, %s31
      %p82 = scmp.eq.s32.totalorder %s81, 0
      %s84 = sadd.s32 %s83, 1
      %s85 = scalar_select %p82, %s83, %s84
      %p88 = pneg %p82
      %p89 = scmp.eq.s32.totalorder %s12, 1
      %p90 = por %p88, %p89
      %p91 = scmp.ne.s32.totalorder %s83, %s86
      %p92 = scmp.eq.s32.totalorder %s12, 0
      %p93 = por %p91, %p92
      %p94 = scmp.ne.s32.totalorder %s83, %s86
      %p95 = scmp.eq.s32.totalorder %s17, 1
      %p96 = por %p94, %p95
      %p97 = scmp.ne.s32.totalorder %s86, %s87
      %p98 = scmp.eq.s32.totalorder %s17, 0
      %p99 = por %p97, %p98
      %p100 = scmp.ne.s32.totalorder %s86, %s87
      %p101 = scmp.eq.s32.totalorder %s18, 1
      %p102 = por %p100, %p101
      %p104 = scmp.ne.s32.totalorder %s87, %s103
      %p105 = scmp.eq.s32.totalorder %s18, 0
      %p106 = por %p104, %p105
      %s107 = ssub.s32 %s19, %s31
      %s108 = ssub.s32 %s20, %s27
      %s109 = sor.u32 %s107, %s108
      %p110 = scmp.eq.s32.totalorder %s109, 0
      %s112 = sadd.s32 %s111, 1
      %s113 = scalar_select %p110, %s111, %s112
      %p116 = pneg %p110
      %p117 = scmp.eq.s32.totalorder %s12, 1
      %p118 = por %p116, %p117
      %p119 = scmp.ne.s32.totalorder %s111, %s114
      %p120 = scmp.eq.s32.totalorder %s12, 0
      %p121 = por %p119, %p120
      %p122 = scmp.ne.s32.totalorder %s111, %s114
      %p123 = scmp.eq.s32.totalorder %s17, 1
      %p124 = por %p122, %p123
      %p125 = scmp.ne.s32.totalorder %s114, %s115
      %p126 = scmp.eq.s32.totalorder %s17, 0
      %p127 = por %p125, %p126
      %p128 = scmp.ne.s32.totalorder %s114, %s115
      %p129 = scmp.eq.s32.totalorder %s18, 1
      %p130 = por %p128, %p129
      %p132 = scmp.ne.s32.totalorder %s115, %s131
      %p133 = scmp.eq.s32.totalorder %s18, 0
      %p134 = por %p132, %p133
      %p135 = scmp.le.s32.totalorder 1, %s12
      %p136 = scmp.lt.s32.totalorder %s12, 3
      %p137 = pnand %p135, %p136
      %p138 = pneg %p137
      // Predicated region
      $region9: #{tpu_custom_call.1} parent=5 // pred_check
        _
      $region10: #{tpu_custom_call.1} parent=5 // pred_check_branch
        %140 = sbr.rel (%p137) target = $region12
      $region11: #{tpu_custom_call.1} parent=5 // pred_region
        %s141 = ssub.s32 %s12, 1
        // Predicated region
        $region13: #{tpu_custom_call.1} parent=11 // pred_check
          %p142 = pneg %p45
        $region14: #{tpu_custom_call.1} parent=11 // pred_check_branch
          %144 = sbr.rel (%p142) target = $region16
        $region15: #{tpu_custom_call.1} parent=11 // pred_region
          _
        $region16: #{tpu_custom_call.1} parent=11 // pred_fallthru
          _
      $region12: #{tpu_custom_call.1} parent=5 // pred_fallthru
        _
      %p145 = scmp.lt.s32.totalorder %s12, 2
      // Predicated region
      $region17: #{tpu_custom_call.1} parent=5 // pred_check
        %p146 = pneg %p145
      $region18: #{tpu_custom_call.1} parent=5 // pred_check_branch
        %148 = sbr.rel (%p146) target = $region20
      $region19: #{tpu_custom_call.1} parent=5 // pred_region
        // Predicated region
        $region21: #{tpu_custom_call.1} parent=19 // pred_check
          %p149 = pneg %p67
        $region22: #{tpu_custom_call.1} parent=19 // pred_check_branch
          %151 = sbr.rel (%p149) target = $region24
        $region23: #{tpu_custom_call.1} parent=19 // pred_region
          %s152 = smul.u32 2, %s20
          %p153 = scmp.lt.s32.totalorder %s19, 1
          %s154 = scalar_select %p153, %s19, 1
          %p155 = scmp.lt.s32.totalorder %s152, 1
          %s156 = scalar_select %p155, %s152, 1
          %s157 = smul.addr %s154, 2
          %s158 = sadd.s32 %s156, %s157
          %s159 = smul.addr %s158, 4
          %s160 = scalar_lea.vmem %s1, %s159
          %s161 = smul.u32 2, %s20
        $region24: #{tpu_custom_call.1} parent=19 // pred_fallthru
          _
        // Predicated region
        $region25: #{tpu_custom_call.1} parent=19 // pred_check
          %p162 = pneg %p93
        $region26: #{tpu_custom_call.1} parent=19 // pred_check_branch
          %164 = sbr.rel (%p162) target = $region28
        $region27: #{tpu_custom_call.1} parent=19 // pred_region
          %p165 = scmp.lt.s32.totalorder %s19, 1
          %s166 = scalar_select %p165, %s19, 1
          %s167 = smul.addr %s166, 4
          %s168 = smul.addr %s167, 8
          %s169 = scalar_lea.vmem %s2, %s168
        $region28: #{tpu_custom_call.1} parent=19 // pred_fallthru
          _
      $region20: #{tpu_custom_call.1} parent=5 // pred_fallthru
        _
      %p170 = scmp.le.s32.totalorder 1, %s12
      %p171 = scmp.lt.s32.totalorder %s12, 3
      %p172 = pnand %p170, %p171
      %p173 = pneg %p172
      // Predicated region
      $region29: #{tpu_custom_call.1} parent=5 // pred_check
        _
      $region30: #{tpu_custom_call.1} parent=5 // pred_check_branch
        %175 = sbr.rel (%p172) target = $region32
      $region31: #{tpu_custom_call.1} parent=5 // pred_region
        %s176 = ssub.s32 %s12, 1
        %p177 = pneg %p45
        %p178 = pneg %p42
        %s179 = smul.u32 2, %s22
        %p180 = scmp.lt.s32.totalorder %s21, 1
        %s181 = scalar_select %p180, %s21, 1
        %p182 = scmp.lt.s32.totalorder %s179, 1
        %s183 = scalar_select %p182, %s179, 1
        %s184 = smul.addr %s181, 2
        %s185 = sadd.s32 %s183, %s184
        %s186 = smul.addr %s185, 4
        %s187 = scalar_lea.vmem %s1, %s186
        %p188 = pneg %p73
        %p189 = pneg %p70
        %p190 = scmp.lt.s32.totalorder %s21, 1
        %s191 = scalar_select %p190, %s21, 1
        %s192 = smul.addr %s191, 4
        %s193 = smul.addr %s192, 8
        %s194 = scalar_lea.vmem %s2, %s193
        %p195 = pneg %p99
        %p196 = pneg %p96
        %p197 = pneg %p127
        %p198 = pneg %p124
        %s199 = sand.u32 %s114, 1
        %s200 = scalar_lea.sflag [#allocation3], %s199
        %s201 = sand.u32 %s114, 1
        %s202 = smul.addr %s201, 64
        %s203 = scalar_lea.vmem [#allocation2], %s202
        %s204 = smul.u32 2, %s22
        %p205 = scmp.lt.s32.totalorder %s21, 1
        %s206 = scalar_select %p205, %s21, 1
        %p207 = scmp.lt.s32.totalorder %s204, 1
        %s208 = scalar_select %p207, %s204, 1
        %s209 = smul.addr %s206, 2
        %s210 = sadd.s32 %s208, %s209
        %s211 = smul.addr %s210, 4
        %s212 = scalar_lea.vmem %s1, %s211
        %s213 = smul.u32 2, %s22
        %p214 = scmp.lt.s32.totalorder %s21, 1
        %s215 = scalar_select %p214, %s21, 1
        %s216 = smul.addr %s215, 4
        %s217 = smul.addr %s216, 8
        %s218 = scalar_lea.vmem %s2, %s217
        %s219 = smul.u32 2, %s22
        %v220 = vld [vmem:[%s0] sm:$0xff]
        %v221 = vld [vmem:[%s0 + $0x8] sm:$0xff]
        %v222 = vld [vmem:[%s0 + $0x10] sm:$0xff]
        %v223 = vld [vmem:[%s0 + $0x18] sm:$0xff]
        %v224 = vld [vmem:[%s212] sm:$0xff]
        %v225 = vld [vmem:[%s218] sm:$0xff]
        %v226 = vld [vmem:[%s218 + $0x8] sm:$0xff]
        %v227 = vld [vmem:[%s218 + $0x10] sm:$0xff]
        %v228 = vld [vmem:[%s218 + $0x18] sm:$0xff]
        %230 = vset.pattern.permute.xlu0 0
        %231 = vperm.xlu0 %230, %v225
        %v232 = vpop.permute.xlu0 %231
        %235 = vset.pattern.permute.xlu0 0
        %236 = vperm.xlu0 %235, %v226
        %v237 = vpop.permute.xlu0 %236
        %240 = vset.pattern.permute.xlu0 0
        %241 = vperm.xlu0 %240, %v227
        %v242 = vpop.permute.xlu0 %241
        %245 = vset.pattern.permute.xlu0 0
        %246 = vperm.xlu0 %245, %v228
        %v247 = vpop.permute.xlu0 %246
        %v250 = vcombine.high %v224, %v224
        %vm251 = vcmask 31744
        %v253 = vsel %vm251, %v220, 0
        %v256 = vsel %vm251, %v221, 0
        %v259 = vsel %vm251, %v222, 0
        %v262 = vsel %vm251, %v223, 0
        %vm264 = vcmask 1043456
        %v265 = vsel %vm264, %v224, 0
        %v267 = vsel %vm264, %v250, 0
        %269 = vmatprep.subr.mxu0 %v267
        %270 = vmatpush1.msra.mxu0 %v265
        %271 = vmatprep.subr.mxu0 0.0
        %272 = vmatpush1.msra.mxu0 0.0
        %273 = vmatprep.subr.mxu0 0.0
        %274 = vmatpush1.msra.mxu0 0.0
        %275 = vmatprep.subr.mxu0 0.0
        %276 = vmatpush1.msra.mxu0 0.0
        %277 = vmatprep.subr.mxu0 0.0
        %278 = vmatpush1.msra.mxu0 0.0
        %279 = vmatprep.subr.mxu0 0.0
        %280 = vmatpush1.msra.mxu0 0.0
        %281 = vmatprep.subr.mxu0 0.0
        %282 = vmatpush1.msra.mxu0 0.0
        %283 = vmatprep.subr.mxu0 0.0
        %284 = vmatpush1.msra.mxu0 0.0
        %285 = vmatprep.subr.mxu0 0.0
        %286 = vmatpush1.msra.mxu0 0.0
        %287 = vmatprep.subr.mxu0 0.0
        %288 = vmatpush1.msra.mxu0 0.0
        %289 = vmatprep.subr.mxu0 0.0
        %290 = vmatpush1.msra.mxu0 0.0
        %291 = vmatprep.subr.mxu0 0.0
        %292 = vmatpush1.msra.mxu0 0.0
        %293 = vmatprep.subr.mxu0 0.0
        %294 = vmatpush1.msra.mxu0 0.0
        %295 = vmatprep.subr.mxu0 0.0
        %296 = vmatpush1.msra.mxu0 0.0
        %297 = vmatprep.subr.mxu0 0.0
        %298 = vmatpush1.msra.mxu0 0.0
        %299 = vmatprep.subr.mxu0 0.0
        %300 = vmatpush1.msra.mxu0 0.0
        %301 = vmatprep.subr.mxu0 0.0
        %302 = vmatpush1.msra.mxu0 0.0
        %303 = vmatprep.subr.mxu0 0.0
        %304 = vmatpush1.msra.mxu0 0.0
        %305 = vmatprep.subr.mxu0 0.0
        %306 = vmatpush1.msra.mxu0 0.0
        %307 = vmatprep.subr.mxu0 0.0
        %308 = vmatpush1.msra.mxu0 0.0
        %309 = vmatprep.subr.mxu0 0.0
        %310 = vmatpush1.msra.mxu0 0.0
        %311 = vmatprep.subr.mxu0 0.0
        %312 = vmatpush1.msra.mxu0 0.0
        %313 = vmatprep.subr.mxu0 0.0
        %314 = vmatpush1.msra.mxu0 0.0
        %315 = vmatprep.subr.mxu0 0.0
        %316 = vmatpush1.msra.mxu0 0.0
        %317 = vmatprep.subr.mxu0 0.0
        %318 = vmatpush1.msra.mxu0 0.0
        %319 = vmatprep.subr.mxu0 0.0
        %320 = vmatpush1.msra.mxu0 0.0
        %321 = vmatprep.subr.mxu0 0.0
        %322 = vmatpush1.msra.mxu0 0.0
        %323 = vmatprep.subr.mxu0 0.0
        %324 = vmatpush1.msra.mxu0 0.0
        %325 = vmatprep.subr.mxu0 0.0
        %326 = vmatpush1.msra.mxu0 0.0
        %327 = vmatprep.subr.mxu0 0.0
        %328 = vmatpush1.msra.mxu0 0.0
        %329 = vmatprep.subr.mxu0 0.0
        %330 = vmatpush1.msra.mxu0 0.0
        %331 = vmatprep.subr.mxu0 0.0
        %332 = vmatpush1.msra.mxu0 0.0
        %333 = vmatprep.mubr.f32.mxu0 0.0
        %334 = vmatmul.mubr.f32.gmra.mrb[0].mxu0 %v253
        %v335 = vpop.f32.mrb[0].mxu0
        %v336 = vadd.f32 %v232, %v335
        %v337 = vpop.f32.mrb[0].mxu0
        %v338 = vadd.f32 %v232, %v337
        %339 = vmatprep.mubr.f32.mxu0 0.0
        %340 = vmatmul.mubr.f32.gmra.mrb[0].mxu0 %v256
        %v341 = vpop.f32.mrb[0].mxu0
        %v342 = vadd.f32 %v237, %v341
        %v343 = vpop.f32.mrb[0].mxu0
        %v344 = vadd.f32 %v237, %v343
        %345 = vmatprep.mubr.f32.mxu0 0.0
        %346 = vmatmul.mubr.f32.gmra.mrb[0].mxu0 %v259
        %v347 = vpop.f32.mrb[0].mxu0
        %v348 = vadd.f32 %v242, %v347
        %v349 = vpop.f32.mrb[0].mxu0
        %v350 = vadd.f32 %v242, %v349
        %351 = vmatprep.mubr.f32.mxu0 0.0
        %352 = vmatmul.mubr.f32.gmra.mrb[0].mxu0 %v262
        %v353 = vpop.f32.mrb[0].mxu0
        %v354 = vadd.f32 %v247, %v353
        %v355 = vpop.f32.mrb[0].mxu0
        %v356 = vadd.f32 %v247, %v355
        %357 = vdwg.mxu0
        %v358 = vxor.u32 %v336, 2147483648
        %v359 = vxor.u32 %v338, 2147483648
        %v360 = vxor.u32 %v342, 2147483648
        %v361 = vxor.u32 %v344, 2147483648
        %v362 = vxor.u32 %v348, 2147483648
        %v363 = vxor.u32 %v350, 2147483648
        %v364 = vxor.u32 %v354, 2147483648
        %v365 = vxor.u32 %v356, 2147483648
        %v366 = vmul.f32 %v358, 1.442695
        %v367 = vpow.pop %v366
        %v368 = vmul.f32 %v359, 1.442695
        %v369 = vpow.pop %v368
        %v370 = vmul.f32 %v360, 1.442695
        %v371 = vpow.pop %v370
        %v372 = vmul.f32 %v361, 1.442695
        %v373 = vpow.pop %v372
        %v374 = vmul.f32 %v362, 1.442695
        %v375 = vpow.pop %v374
        %v376 = vmul.f32 %v363, 1.442695
        %v377 = vpow.pop %v376
        %v378 = vmul.f32 %v364, 1.442695
        %v379 = vpow.pop %v378
        %v380 = vmul.f32 %v365, 1.442695
        %v381 = vpow.pop %v380
        %v382 = vadd.f32 %v367, 1.0
        %v383 = vadd.f32 %v369, 1.0
        %v384 = vadd.f32 %v371, 1.0
        %v385 = vadd.f32 %v373, 1.0
        %v386 = vadd.f32 %v375, 1.0
        %v387 = vadd.f32 %v377, 1.0
        %v388 = vadd.f32 %v379, 1.0
        %v389 = vadd.f32 %v381, 1.0
        %v390 = vrcp.pop %v382
        %v391 = vmul.f32 1.0, %v390
        %v392 = vrcp.pop %v383
        %v393 = vmul.f32 1.0, %v392
        %v394 = vrcp.pop %v384
        %v395 = vmul.f32 1.0, %v394
        %v396 = vrcp.pop %v385
        %v397 = vmul.f32 1.0, %v396
        %v398 = vrcp.pop %v386
        %v399 = vmul.f32 1.0, %v398
        %v400 = vrcp.pop %v387
        %v401 = vmul.f32 1.0, %v400
        %v402 = vrcp.pop %v388
        %v403 = vmul.f32 1.0, %v402
        %v404 = vrcp.pop %v389
        %v405 = vmul.f32 1.0, %v404
        %v406 = vmul.f32 %v336, %v391
        %v407 = vmul.f32 %v338, %v393
        %v408 = vmul.f32 %v342, %v395
        %v409 = vmul.f32 %v344, %v397
        %v410 = vmul.f32 %v348, %v399
        %v411 = vmul.f32 %v350, %v401
        %v412 = vmul.f32 %v354, %v403
        %v413 = vmul.f32 %v356, %v405
        %414 = vst [vmem:[%s203] sm:$0xff] %v406
        %415 = vst [vmem:[%s203 + $0x8] sm:$0xff] %v407
        %416 = vst [vmem:[%s203 + $0x10] sm:$0xff] %v408
        %417 = vst [vmem:[%s203 + $0x18] sm:$0xff] %v409
        %418 = vst [vmem:[%s203 + $0x20] sm:$0xff] %v410
        %419 = vst [vmem:[%s203 + $0x28] sm:$0xff] %v411
        %420 = vst [vmem:[%s203 + $0x30] sm:$0xff] %v412
        %421 = vst [vmem:[%s203 + $0x38] sm:$0xff] %v413
        %s422 = sand.u32 %s114, 1
        %s423 = scalar_lea.sflag [#allocation3], %s422
        %s424 = sand.u32 %s114, 1
        %s425 = smul.addr %s424, 64
        %s426 = scalar_lea.vmem [#allocation2], %s425
        // Predicated region
        $region33: #{tpu_custom_call.1} parent=31 // pred_check
          %p427 = pneg %p124
        $region34: #{tpu_custom_call.1} parent=31 // pred_check_branch
          %429 = sbr.rel (%p427) target = $region36
        $region35: #{tpu_custom_call.1} parent=31 // pred_region
          %s430 = smul.u32 2, %s22
          %s432 = ssub.s32 1024, 1024
          %433 = vsyncadd %s423, %s432
          %s434 = smul.addr %s21, 8
          %s435 = sadd.s32 %s430, %s434
          %s436 = smul.addr %s435, 128
          %s437 = scalar_lea.hbm %s3, %s436
          %s438 = sshll.u32 %s426, 4
          %s439 = int_to_ptr.vmem [resolvable:$true] %s438
          %444 = dma.vmem_to_hbm [thread:$0]  %s439, 1024, %s437, %s423, 256, 256, 16
        $region36: #{tpu_custom_call.1} parent=31 // pred_fallthru
          _
      $region32: #{tpu_custom_call.1} parent=5 // pred_fallthru
        _
      %p445 = scmp.le.s32.totalorder 2, %s12
      // Predicated region
      $region37: #{tpu_custom_call.1} parent=5 // pred_check
        %p446 = pneg %p445
      $region38: #{tpu_custom_call.1} parent=5 // pred_check_branch
        %448 = sbr.rel (%p446) target = $region40
      $region39: #{tpu_custom_call.1} parent=5 // pred_region
        %s449 = ssub.s32 %s12, 2
        // Predicated region
        $region41: #{tpu_custom_call.1} parent=39 // pred_check
          %p450 = pneg %p130
        $region42: #{tpu_custom_call.1} parent=39 // pred_check_branch
          %452 = sbr.rel (%p450) target = $region44
        $region43: #{tpu_custom_call.1} parent=39 // pred_region
          %s453 = sand.u32 %s115, 1
          %s454 = scalar_lea.sflag [#allocation3], %s453
          %s455 = sand.u32 %s115, 1
          %s456 = smul.addr %s455, 64
          %s457 = scalar_lea.vmem [#allocation2], %s456
          %458 = dma.done %s454, 1024
        $region44: #{tpu_custom_call.1} parent=39 // pred_fallthru
          _
      $region40: #{tpu_custom_call.1} parent=5 // pred_fallthru
        _
    $region6: #{tpu_custom_call.1} parent=1 // loop_footer
      %s16 = sadd.s32 1, %s12
    $region7: #{tpu_custom_call.1} parent=1 // loop_footer_branch
      %11 = sbr.rel target = $region3
    $region8: #{tpu_custom_call.1} parent=1 // loop_exit
      _
    %459 = vsyncpa [#allocation3], 1
    %s460 = scalar_lea.sflag [#allocation3], 1
    %461 = vsyncpa %s460, 1

</llo_original>
